<compile_context>
chip_gen: v7x
topology: tpu7x:2x2x1
jax: 0.10.0
libtpu: 0.0.40
codegen_flags: <defaults>
</compile_context>

<pallas_src>
import jax
import jax.numpy as jnp
import numpy as np
from jax.experimental import pallas as pl
from jax.experimental.pallas import tpu as pltpu


def koopman_kernel(u_ref, vs_ref, x_ref, o_ref):
    # u_ref : (D, D)     U[t]
    # vs_ref: (D, D)     V[t] @ diag(sorted |sigma[t, m]|)  (pre-folded on host)
    # x_ref : (B, T, D)  observables for dynamics system m (all batch elements)
    # o_ref : (B, T, D)  output slab -> out[:, m, t*T:(t+1)*T, :]
    u = u_ref[...]
    vs = vs_ref[...]
    B, T, D = x_ref.shape
    x = x_ref[...].reshape(B * T, D)          # tile-aligned flatten (T == 8)

    # y = x @ K^T with K = U diag(s) V^T  ==>  y = (x @ Vs) @ U^T
    xv = jnp.dot(x, vs, preferred_element_type=jnp.float32)           # (B*T, D)
    y = jax.lax.dot_general(xv, u, (((1,), (1,)), ((), ())),
                            preferred_element_type=jnp.float32)       # (B*T, D)
    o_ref[...] = y.reshape(B, T, D).astype(o_ref.dtype)


def apply_koopmans_pallas(U, V, sigmas, observables):
    """
    U, V       : (k, D, D)  float32
    sigmas     : (k, M, D)  float32 (raw singular values, unsorted)
    observables: (B, M, T, D) float32
    returns    : (B, M, k*T, D) float32
    """
    k, D, _ = U.shape
    B, M, T, _ = observables.shape

    # Host-side glue: sort |sigma| descending and fold it into V so the kernel
    # never touches a sub-512 B sigma block:  Vs[t, m] = V[t] @ diag(s[t, m]).
    s_sorted = jnp.sort(jnp.abs(sigmas), axis=-1)[..., ::-1]          # (k, M, D)
    Vs = V[:, None, :, :] * s_sorted[:, :, None, :]                   # (k, M, D, D)

    grid = (k, M)

    out = pl.pallas_call(
        koopman_kernel,
        out_shape=jax.ShapeDtypeStruct((B, M, k * T, D), jnp.float32),
        grid_spec=pltpu.PrefetchScalarGridSpec(
            num_scalar_prefetch=0,
            grid=grid,
            in_specs=[
                pl.BlockSpec((None, D, D), lambda t, m: (t, 0, 0)),          # U[t]
                pl.BlockSpec((None, None, D, D), lambda t, m: (t, m, 0, 0)), # Vs[t, m]
                pl.BlockSpec((B, None, T, D), lambda t, m: (0, m, 0, 0)),    # x[:, m]
            ],
            out_specs=pl.BlockSpec((B, None, T, D),
                                   lambda t, m: (0, m, t, 0)),
        ),
        compiler_params=pltpu.CompilerParams(
            dimension_semantics=("parallel", "parallel")),
    )(U, Vs, observables)
    return out


def apply_koopmans_reference(U, V, sigmas, observables):
    """Pure-JAX reference of the PyTorch semantics."""
    k, D, _ = U.shape
    B, M, T, _ = observables.shape
    s_sorted = jnp.sort(jnp.abs(sigmas), axis=-1)[..., ::-1]          # (k, M, D)
    outs = []
    for t in range(k):
        # K[t] : (M, D, D) = U[t] @ diag(s[t, m]) @ V[t]^T
        Kt = jnp.einsum('ij,mj,kj->mik', U[t], s_sorted[t], V[t])
        # bmm(K repeated over batch, x^T)^T == x @ K^T
        yt = jnp.einsum('bmtd,mcd->bmtc', observables, Kt)            # (B, M, T, D)
        outs.append(yt)
    return jnp.concatenate(outs, axis=2)                              # (B, M, k*T, D)


def make_params(key, k_forward_prediction, m_dynamics, observable_dim,
                min_init_eig_val=0.01, max_init_eig_val=1.0):
    """Deterministic parameter init mirroring BaseMIDST.__init__ (non-dmf path)."""
    ku, kv = jax.random.split(key)
    # Orthogonal U, V per t (ortho_group.rvs analogue via QR of a Gaussian).
    def ortho(k_):
        g = jax.random.normal(k_, (observable_dim, observable_dim), jnp.float32)
        q, _ = jnp.linalg.qr(g)
        return q
    U = jnp.stack([ortho(kk) for kk in jax.random.split(ku, k_forward_prediction)])
    V = jnp.stack([ortho(kk) for kk in jax.random.split(kv, k_forward_prediction)])
    # sigmas: linspace(max_eig, min_eig, D) per (t, m)
    sig = jnp.linspace(max_init_eig_val, min_init_eig_val, observable_dim,
                       dtype=jnp.float32)
    sigmas = jnp.broadcast_to(sig, (k_forward_prediction, m_dynamics,
                                    observable_dim)).astype(jnp.float32)
    return U, V, sigmas


if __name__ == "__main__":
    # Small, module-consistent shapes.
    B = 2                 # batch
    M = 3                 # m_dynamics
    T = 8                 # sequence length (observables.shape[2])
    D = 64                # observable_dim
    K_FWD = 2             # k_forward_prediction

    key = jax.random.PRNGKey(0)
    kp, kx = jax.random.split(key)
    U, V, sigmas = make_params(kp, K_FWD, M, D)
    observables = jax.random.normal(kx, (B, M, T, D), jnp.float32)

    out = apply_koopmans_pallas(U, V, sigmas, observables)
    out = jax.block_until_ready(out)

    ref = apply_koopmans_reference(U, V, sigmas, observables)
    np.testing.assert_allclose(np.asarray(out), np.asarray(ref),
                               rtol=1e-5, atol=1e-5)
    assert out.shape == (B, M, K_FWD * T, D)
    print("KERNEL_OK")
</pallas_src>

<mosaic_0001>
module attributes {stable_mosaic.version = 11 : i64} {
  func.func @koopman_kernel(%arg0: i32, %arg1: i32, %arg2: memref<1x64x64xf32, #tpu.memory_space<vmem>>, %arg3: memref<1x1x64x64xf32, #tpu.memory_space<vmem>>, %arg4: memref<2x1x8x64xf32, #tpu.memory_space<vmem>>, %arg5: memref<2x1x8x64xf32, #tpu.memory_space<vmem>>) attributes {dimension_semantics = [#tpu.dimension_semantics<parallel>, #tpu.dimension_semantics<parallel>], iteration_bounds = array<i64: 2, 3>, scalar_prefetch = 0 : i64, scratch_operands = 0 : i64, tpu.core_type = #tpu.core_type<tc>, window_params = [{transform_indices = @transform_0, window_bounds = array<i64: 1, 64, 64>}, {transform_indices = @transform_1, window_bounds = array<i64: 1, 1, 64, 64>}, {transform_indices = @transform_2, window_bounds = array<i64: 2, 1, 8, 64>}, {transform_indices = @transform_3, window_bounds = array<i64: 2, 1, 8, 64>}]} {
    %c0 = arith.constant 0 : index
    %c0_0 = arith.constant 0 : index
    %c0_1 = arith.constant 0 : index
    %0 = vector.load %arg2[%c0, %c0_0, %c0_1] : memref<1x64x64xf32, #tpu.memory_space<vmem>>, vector<1x64x64xf32>
    %1 = vector.shape_cast %0 : vector<1x64x64xf32> to vector<64x64xf32>
    %c0_2 = arith.constant 0 : index
    %c0_3 = arith.constant 0 : index
    %c0_4 = arith.constant 0 : index
    %c0_5 = arith.constant 0 : index
    %2 = vector.load %arg3[%c0_2, %c0_3, %c0_4, %c0_5] : memref<1x1x64x64xf32, #tpu.memory_space<vmem>>, vector<1x1x64x64xf32>
    %3 = vector.shape_cast %2 : vector<1x1x64x64xf32> to vector<64x64xf32>
    %c0_6 = arith.constant 0 : index
    %c0_7 = arith.constant 0 : index
    %c0_8 = arith.constant 0 : index
    %c0_9 = arith.constant 0 : index
    %4 = vector.load %arg4[%c0_6, %c0_7, %c0_8, %c0_9] : memref<2x1x8x64xf32, #tpu.memory_space<vmem>>, vector<2x1x8x64xf32>
    %5 = vector.shape_cast %4 : vector<2x1x8x64xf32> to vector<2x8x64xf32>
    %6 = vector.shape_cast %5 : vector<2x8x64xf32> to vector<16x64xf32>
    %cst = arith.constant dense<0.000000e+00> : vector<16x64xf32>
    %7 = tpu.matmul %6, %3, %cst {dimension_numbers = #tpu.dot_dimension_numbers<[1], [0], [0], [1], [0, 0, 1, 1], [], []>} : vector<16x64xf32>, vector<64x64xf32>, vector<16x64xf32> -> vector<16x64xf32>
    %cst_10 = arith.constant dense<0.000000e+00> : vector<16x64xf32>
    %8 = tpu.matmul %7, %1, %cst_10 {dimension_numbers = #tpu.dot_dimension_numbers<[1], [1], [0], [0], [0, 0, 1, 0], [], []>} : vector<16x64xf32>, vector<64x64xf32>, vector<16x64xf32> -> vector<16x64xf32>
    %9 = vector.shape_cast %8 : vector<16x64xf32> to vector<2x8x64xf32>
    %c0_11 = arith.constant 0 : index
    %c0_12 = arith.constant 0 : index
    %c0_13 = arith.constant 0 : index
    %c0_14 = arith.constant 0 : index
    %10 = vector.load %arg5[%c0_11, %c0_12, %c0_13, %c0_14] : memref<2x1x8x64xf32, #tpu.memory_space<vmem>>, vector<2x1x8x64xf32>
    %11 = vector.shape_cast %10 : vector<2x1x8x64xf32> to vector<2x8x64xf32>
    %12 = vector.shape_cast %9 : vector<2x8x64xf32> to vector<2x1x8x64xf32>
    tpu.vector_store %arg5[%c0_11, %c0_12, %c0_13, %c0_14], %12 {strides = array<i32>} : memref<2x1x8x64xf32, #tpu.memory_space<vmem>>, vector<2x1x8x64xf32>,
    return
  }
  func.func @transform_0(%arg0: i32, %arg1: i32) -> (i32, i32, i32) {
    %c0_i32 = arith.constant 0 : i32
    %c0_i32_0 = arith.constant 0 : i32
    %c0_i32_1 = arith.constant 0 : i32
    return %arg0, %c0_i32, %c0_i32_0 : i32, i32, i32
  }
  func.func @transform_1(%arg0: i32, %arg1: i32) -> (i32, i32, i32, i32) {
    %c0_i32 = arith.constant 0 : i32
    %c0_i32_0 = arith.constant 0 : i32
    %c0_i32_1 = arith.constant 0 : i32
    return %arg0, %arg1, %c0_i32, %c0_i32_0 : i32, i32, i32, i32
  }
  func.func @transform_2(%arg0: i32, %arg1: i32) -> (i32, i32, i32, i32) {
    %c0_i32 = arith.constant 0 : i32
    %c0_i32_0 = arith.constant 0 : i32
    %c0_i32_1 = arith.constant 0 : i32
    %c0_i32_2 = arith.constant 0 : i32
    return %c0_i32, %arg1, %c0_i32_0, %c0_i32_1 : i32, i32, i32, i32
  }
  func.func @transform_3(%arg0: i32, %arg1: i32) -> (i32, i32, i32, i32) {
    %c0_i32 = arith.constant 0 : i32
    %c0_i32_0 = arith.constant 0 : i32
    %c0_i32_1 = arith.constant 0 : i32
    return %c0_i32, %arg1, %arg0, %c0_i32_0 : i32, i32, i32, i32
  }
}

</mosaic_0001>

<llo_original>
// kernel: tpu_custom_call.1
$region0: #{tpu_custom_call.1}
  #allocation0 [shape = 'u32[]', space=smem, size = 0x4, offset = 0x4, fixed_abs, tag = 'smem constant byte address 0x4 - core index']
  #allocation1 [shape = 'u32[144,128]{1,0:T(1,128)}', space=vmem, size = 0x12000, scoped, tag = 'internal scratch']
  %s0 = inlined_call_operand.hbm [shape: f32[2,64,64], index: 0, kind: input, shape index: {}]
  %s1 = inlined_call_operand.hbm [shape: f32[2,3,64,64], index: 1, kind: input, shape index: {}]
  %s2 = inlined_call_operand.hbm [shape: f32[2,3,8,64], index: 2, kind: input, shape index: {}]
  %s3 = inlined_call_operand.hbm [shape: f32[2,3,16,64], index: 3, kind: output, shape index: {}]
  %s4 = sld [smem:[#allocation0]]
  $region57: #{tpu_custom_call.1} parent=0
    _
  %s6 = ssub.s32 1, %s4
  %s7 = scalar_select 0, %s6, %s4
  $region1: #{tpu_custom_call.1} parent=0
    #allocation2 [shape = 'u8[65536]{0}', space=vmem, size = 0x10000, scoped, tag = 'input window, operand 0']
    #allocation3 [shape = 's32[2]{0}', space=sflag, size = 0x8, scoped, tag = 'scoped memory for tpu_custom_call.1']
    #allocation4 [shape = 's32[2]{0}', space=sflag, size = 0x8, scoped, tag = 'scoped memory for tpu_custom_call.1']
    #allocation5 [shape = 'u8[65536]{0}', space=vmem, size = 0x10000, scoped, tag = 'input window, operand 1']
    #allocation6 [shape = 's32[2]{0}', space=sflag, size = 0x8, scoped, tag = 'scoped memory for tpu_custom_call.1']
    #allocation7 [shape = 'u8[16384]{0}', space=vmem, size = 0x4000, scoped, tag = 'input window, operand 2']
    #allocation8 [shape = 'u8[16384]{0}', space=vmem, size = 0x4000, scoped, tag = 'output window, operand 0']
    %8 = vsyncpa [#allocation3], 0
    %s9 = scalar_lea.sflag [#allocation3], 1
    %10 = vsyncpa %s9, 0
    %11 = vsyncpa [#allocation6], 0
    %s12 = scalar_lea.sflag [#allocation6], 1
    %13 = vsyncpa %s12, 0
    %14 = vsyncpa [#allocation4], 0
    %s15 = scalar_lea.sflag [#allocation4], 1
    %16 = vsyncpa %s15, 0
    loop: start=0, step=1, limit=8
    $region2: #{tpu_custom_call.1} parent=1 // loop_pre_header
      _
    $region3: #{tpu_custom_call.1} parent=1 // loop_header
      %s18 = sphi 0, %s22
      %p19 = scmp.ge.s32.totalorder %s18, 8
      %s25 = sphi 0, %s37
      %s26 = sphi 0, %s33
      %s27 = sphi 0, %s25
      %s28 = sphi 0, %s26
      %s29 = sphi 0, %s27
      %s30 = sphi 0, %s28
      %s40 = sphi 0, %s42
      %s43 = sphi 0, %s40
      %s44 = sphi 0, %s43
      %s60 = sphi 0, %s44
      %s68 = sphi 0, %s70
      %s71 = sphi 0, %s68
      %s72 = sphi 0, %s71
      %s88 = sphi 0, %s72
      %s94 = sphi 0, %s96
      %s97 = sphi 0, %s94
      %s98 = sphi 0, %s97
      %s114 = sphi 0, %s98
      %s122 = sphi 0, %s124
      %s125 = sphi 0, %s122
      %s126 = sphi 0, %s125
      %s142 = sphi 0, %s126
    $region4: #{tpu_custom_call.1} parent=1 // loop_header_branch
      %21 = sbr.rel (%p19) target = $region8
    $region5: #{tpu_custom_call.1} parent=1 // loop_body
      %s23 = ssub.s32 %s18, 1
      %s24 = ssub.s32 %s18, 2
      %s31 = sadd.s32 1, %s26
      %p32 = scmp.ge.s32.totalorder %s31, 3
      %s33 = scalar_select %p32, 0, %s31
      %s34 = sadd.s32 1, %s25
      %s35 = scalar_select %p32, %s34, %s25
      %p36 = scmp.ge.s32.totalorder %s35, 2
      %s37 = scalar_select %p36, 0, %s35
      %s38 = ssub.s32 %s25, %s37
      %p39 = scmp.eq.s32.totalorder %s38, 0
      %s41 = sadd.s32 %s40, 1
      %s42 = scalar_select %p39, %s40, %s41
      %p45 = pneg %p39
      %p46 = scmp.eq.s32.totalorder %s18, 5
      %p47 = por %p45, %p46
      %p48 = scmp.ne.s32.totalorder %s40, %s43
      %p49 = scmp.eq.s32.totalorder %s18, 0
      %p50 = por %p48, %p49
      %p51 = scmp.ne.s32.totalorder %s40, %s43
      %p52 = scmp.eq.s32.totalorder %s23, 5
      %p53 = por %p51, %p52
      %p54 = scmp.ne.s32.totalorder %s43, %s44
      %p55 = scmp.eq.s32.totalorder %s23, 0
      %p56 = por %p54, %p55
      %p57 = scmp.ne.s32.totalorder %s43, %s44
      %p58 = scmp.eq.s32.totalorder %s24, 5
      %p59 = por %p57, %p58
      %p61 = scmp.ne.s32.totalorder %s44, %s60
      %p62 = scmp.eq.s32.totalorder %s24, 0
      %p63 = por %p61, %p62
      %s64 = ssub.s32 %s25, %s37
      %s65 = ssub.s32 %s26, %s33
      %s66 = sor.u32 %s64, %s65
      %p67 = scmp.eq.s32.totalorder %s66, 0
      %s69 = sadd.s32 %s68, 1
      %s70 = scalar_select %p67, %s68, %s69
      %p73 = pneg %p67
      %p74 = scmp.eq.s32.totalorder %s18, 5
      %p75 = por %p73, %p74
      %p76 = scmp.ne.s32.totalorder %s68, %s71
      %p77 = scmp.eq.s32.totalorder %s18, 0
      %p78 = por %p76, %p77
      %p79 = scmp.ne.s32.totalorder %s68, %s71
      %p80 = scmp.eq.s32.totalorder %s23, 5
      %p81 = por %p79, %p80
      %p82 = scmp.ne.s32.totalorder %s71, %s72
      %p83 = scmp.eq.s32.totalorder %s23, 0
      %p84 = por %p82, %p83
      %p85 = scmp.ne.s32.totalorder %s71, %s72
      %p86 = scmp.eq.s32.totalorder %s24, 5
      %p87 = por %p85, %p86
      %p89 = scmp.ne.s32.totalorder %s72, %s88
      %p90 = scmp.eq.s32.totalorder %s24, 0
      %p91 = por %p89, %p90
      %s92 = ssub.s32 %s26, %s33
      %p93 = scmp.eq.s32.totalorder %s92, 0
      %s95 = sadd.s32 %s94, 1
      %s96 = scalar_select %p93, %s94, %s95
      %p99 = pneg %p93
      %p100 = scmp.eq.s32.totalorder %s18, 5
      %p101 = por %p99, %p100
      %p102 = scmp.ne.s32.totalorder %s94, %s97
      %p103 = scmp.eq.s32.totalorder %s18, 0
      %p104 = por %p102, %p103
      %p105 = scmp.ne.s32.totalorder %s94, %s97
      %p106 = scmp.eq.s32.totalorder %s23, 5
      %p107 = por %p105, %p106
      %p108 = scmp.ne.s32.totalorder %s97, %s98
      %p109 = scmp.eq.s32.totalorder %s23, 0
      %p110 = por %p108, %p109
      %p111 = scmp.ne.s32.totalorder %s97, %s98
      %p112 = scmp.eq.s32.totalorder %s24, 5
      %p113 = por %p111, %p112
      %p115 = scmp.ne.s32.totalorder %s98, %s114
      %p116 = scmp.eq.s32.totalorder %s24, 0
      %p117 = por %p115, %p116
      %s118 = ssub.s32 %s26, %s33
      %s119 = ssub.s32 %s25, %s37
      %s120 = sor.u32 %s118, %s119
      %p121 = scmp.eq.s32.totalorder %s120, 0
      %s123 = sadd.s32 %s122, 1
      %s124 = scalar_select %p121, %s122, %s123
      %p127 = pneg %p121
      %p128 = scmp.eq.s32.totalorder %s18, 5
      %p129 = por %p127, %p128
      %p130 = scmp.ne.s32.totalorder %s122, %s125
      %p131 = scmp.eq.s32.totalorder %s18, 0
      %p132 = por %p130, %p131
      %p133 = scmp.ne.s32.totalorder %s122, %s125
      %p134 = scmp.eq.s32.totalorder %s23, 5
      %p135 = por %p133, %p134
      %p136 = scmp.ne.s32.totalorder %s125, %s126
      %p137 = scmp.eq.s32.totalorder %s23, 0
      %p138 = por %p136, %p137
      %p139 = scmp.ne.s32.totalorder %s125, %s126
      %p140 = scmp.eq.s32.totalorder %s24, 5
      %p141 = por %p139, %p140
      %p143 = scmp.ne.s32.totalorder %s126, %s142
      %p144 = scmp.eq.s32.totalorder %s24, 0
      %p145 = por %p143, %p144
      %p146 = scmp.le.s32.totalorder 1, %s18
      %p147 = scmp.lt.s32.totalorder %s18, 7
      %p148 = pnand %p146, %p147
      %p149 = pneg %p148
      // Predicated region
      $region9: #{tpu_custom_call.1} parent=5 // pred_check
        _
      $region10: #{tpu_custom_call.1} parent=5 // pred_check_branch
        %151 = sbr.rel (%p148) target = $region12
      $region11: #{tpu_custom_call.1} parent=5 // pred_region
        %s152 = ssub.s32 %s18, 1
      $region12: #{tpu_custom_call.1} parent=5 // pred_fallthru
        _
      %p153 = scmp.lt.s32.totalorder %s18, 6
      // Predicated region
      $region13: #{tpu_custom_call.1} parent=5 // pred_check
        %p154 = pneg %p153
      $region14: #{tpu_custom_call.1} parent=5 // pred_check_branch
        %156 = sbr.rel (%p154) target = $region16
      $region15: #{tpu_custom_call.1} parent=5 // pred_region
        // Predicated region
        $region17: #{tpu_custom_call.1} parent=15 // pred_check
          %p157 = pneg %p50
        $region18: #{tpu_custom_call.1} parent=15 // pred_check_branch
          %159 = sbr.rel (%p157) target = $region20
        $region19: #{tpu_custom_call.1} parent=15 // pred_region
          %s160 = sand.u32 %s40, 1
          %s161 = scalar_lea.sflag [#allocation3], %s160
          %s162 = sand.u32 %s40, 1
          %s163 = smul.addr %s162, 64
          %s164 = scalar_lea.vmem [#allocation2], %s163
          %s166 = ssub.s32 1024, 1024
          %167 = vsyncadd %s161, %s166
          %s168 = smul.addr %s25, 8
          %s169 = smul.addr %s168, 128
          %s170 = scalar_lea.hbm %s0, %s169
          %s171 = sshll.u32 %s164, 4
          %s172 = int_to_ptr.vmem [resolvable:$true] %s171
          %177 = dma.hbm_to_vmem [thread:$0]  %s170, 1024, %s172, %s161, 128, 128, 8
        $region20: #{tpu_custom_call.1} parent=15 // pred_fallthru
          _
        // Predicated region
        $region21: #{tpu_custom_call.1} parent=15 // pred_check
          %p178 = pneg %p78
        $region22: #{tpu_custom_call.1} parent=15 // pred_check_branch
          %180 = sbr.rel (%p178) target = $region24
        $region23: #{tpu_custom_call.1} parent=15 // pred_region
          %s181 = sand.u32 %s18, 1
          %s182 = scalar_lea.sflag [#allocation6], %s181
          %s183 = sand.u32 %s68, 1
          %s184 = smul.addr %s183, 64
          %s185 = scalar_lea.vmem [#allocation5], %s184
          %s187 = ssub.s32 1024, 1024
          %188 = vsyncadd %s182, %s187
          %s189 = smul.addr %s26, 8
          %s190 = smul.addr %s25, 24
          %s191 = sadd.s32 %s189, %s190
          %s192 = smul.addr %s191, 128
          %s193 = scalar_lea.hbm %s1, %s192
          %s194 = sshll.u32 %s185, 4
          %s195 = int_to_ptr.vmem [resolvable:$true] %s194
          %200 = dma.hbm_to_vmem [thread:$0]  %s193, 1024, %s195, %s182, 128, 128, 8
        $region24: #{tpu_custom_call.1} parent=15 // pred_fallthru
          _
        // Predicated region
        $region25: #{tpu_custom_call.1} parent=15 // pred_check
          %p201 = pneg %p104
        $region26: #{tpu_custom_call.1} parent=15 // pred_check_branch
          %203 = sbr.rel (%p201) target = $region28
        $region27: #{tpu_custom_call.1} parent=15 // pred_region
          %s204 = sand.u32 %s18, 1
          %s205 = scalar_lea.sflag [#allocation6], %s204
          %s206 = sand.u32 %s94, 1
          %s207 = smul.addr %s206, 16
          %s208 = scalar_lea.vmem [#allocation7], %s207
          %s210 = ssub.s32 256, 256
          %211 = vsyncadd %s205, %s210
          %s212 = smul.addr %s26, 128
          %s213 = scalar_lea.hbm %s2, %s212
          %s214 = sshll.u32 %s208, 4
          %s215 = int_to_ptr.vmem [resolvable:$true] %s214
          %220 = dma.hbm_to_vmem [thread:$0]  %s213, 256, %s215, %s205, 384, 128, 8
        $region28: #{tpu_custom_call.1} parent=15 // pred_fallthru
          _
      $region16: #{tpu_custom_call.1} parent=5 // pred_fallthru
        _
      %p221 = scmp.le.s32.totalorder 1, %s18
      %p222 = scmp.lt.s32.totalorder %s18, 7
      %p223 = pnand %p221, %p222
      %p224 = pneg %p223
      // Predicated region
      $region29: #{tpu_custom_call.1} parent=5 // pred_check
        _
      $region30: #{tpu_custom_call.1} parent=5 // pred_check_branch
        %226 = sbr.rel (%p223) target = $region32
      $region31: #{tpu_custom_call.1} parent=5 // pred_region
        %s227 = ssub.s32 %s18, 1
        %s228 = sand.u32 %s43, 1
        %s229 = scalar_lea.sflag [#allocation3], %s228
        %s230 = sand.u32 %s43, 1
        %s231 = smul.addr %s230, 64
        %s232 = scalar_lea.vmem [#allocation2], %s231
        // Predicated region
        $region33: #{tpu_custom_call.1} parent=31 // pred_check
          %p233 = pneg %p56
        $region34: #{tpu_custom_call.1} parent=31 // pred_check_branch
          %235 = sbr.rel (%p233) target = $region36
        $region35: #{tpu_custom_call.1} parent=31 // pred_region
          %236 = dma.done %s229, 1024
        $region36: #{tpu_custom_call.1} parent=31 // pred_fallthru
          _
        %s237 = sand.u32 %s23, 1
        %s238 = scalar_lea.sflag [#allocation6], %s237
        %s239 = sand.u32 %s71, 1
        %s240 = smul.addr %s239, 64
        %s241 = scalar_lea.vmem [#allocation5], %s240
        // Predicated region
        $region37: #{tpu_custom_call.1} parent=31 // pred_check
          %p242 = pneg %p84
        $region38: #{tpu_custom_call.1} parent=31 // pred_check_branch
          %244 = sbr.rel (%p242) target = $region40
        $region39: #{tpu_custom_call.1} parent=31 // pred_region
          %245 = dma.done %s238, 1024
        $region40: #{tpu_custom_call.1} parent=31 // pred_fallthru
          _
        %s246 = sand.u32 %s23, 1
        %s247 = scalar_lea.sflag [#allocation6], %s246
        %s248 = sand.u32 %s97, 1
        %s249 = smul.addr %s248, 16
        %s250 = scalar_lea.vmem [#allocation7], %s249
        // Predicated region
        $region41: #{tpu_custom_call.1} parent=31 // pred_check
          %p251 = pneg %p110
        $region42: #{tpu_custom_call.1} parent=31 // pred_check_branch
          %253 = sbr.rel (%p251) target = $region44
        $region43: #{tpu_custom_call.1} parent=31 // pred_region
          %254 = dma.done %s247, 256
        $region44: #{tpu_custom_call.1} parent=31 // pred_fallthru
          _
        %s255 = sand.u32 %s43, 1
        %s256 = scalar_lea.sflag [#allocation3], %s255
        %s257 = sand.u32 %s43, 1
        %s258 = smul.addr %s257, 64
        %s259 = scalar_lea.vmem [#allocation2], %s258
        %p260 = pneg %p56
        %p261 = pneg %p53
        %s262 = sand.u32 %s23, 1
        %s263 = scalar_lea.sflag [#allocation6], %s262
        %s264 = sand.u32 %s71, 1
        %s265 = smul.addr %s264, 64
        %s266 = scalar_lea.vmem [#allocation5], %s265
        %p267 = pneg %p84
        %p268 = pneg %p81
        %s269 = sand.u32 %s23, 1
        %s270 = scalar_lea.sflag [#allocation6], %s269
        %s271 = sand.u32 %s97, 1
        %s272 = smul.addr %s271, 16
        %s273 = scalar_lea.vmem [#allocation7], %s272
        %p274 = pneg %p110
        %p275 = pneg %p107
        %p276 = pneg %p138
        %p277 = pneg %p135
        %s278 = sand.u32 %s125, 1
        %s279 = scalar_lea.sflag [#allocation4], %s278
        %s280 = sand.u32 %s125, 1
        %s281 = smul.addr %s280, 16
        %s282 = scalar_lea.vmem [#allocation8], %s281
        %v283 = vld [vmem:[%s232] sm:$0xff]
        %v284 = vld [vmem:[%s232 + $0x8] sm:$0xff]
        %v285 = vld [vmem:[%s232 + $0x10] sm:$0xff]
        %v286 = vld [vmem:[%s232 + $0x18] sm:$0xff]
        %v287 = vld [vmem:[%s232 + $0x20] sm:$0xff]
        %v288 = vld [vmem:[%s232 + $0x28] sm:$0xff]
        %v289 = vld [vmem:[%s232 + $0x30] sm:$0xff]
        %v290 = vld [vmem:[%s232 + $0x38] sm:$0xff]
        %v291 = vld [vmem:[%s241] sm:$0xff]
        %v292 = vld [vmem:[%s241 + $0x8] sm:$0xff]
        %v293 = vld [vmem:[%s241 + $0x10] sm:$0xff]
        %v294 = vld [vmem:[%s241 + $0x18] sm:$0xff]
        %v295 = vld [vmem:[%s241 + $0x20] sm:$0xff]
        %v296 = vld [vmem:[%s241 + $0x28] sm:$0xff]
        %v297 = vld [vmem:[%s241 + $0x30] sm:$0xff]
        %v298 = vld [vmem:[%s241 + $0x38] sm:$0xff]
        %v299 = vld [vmem:[%s250] sm:$0xff]
        %v300 = vld [vmem:[%s250 + $0x8] sm:$0xff]
        %vm301 = vcmask 523264
        %v303 = vsel %vm301, %v299, 0
        %v306 = vsel %vm301, %v300, 0
        %308 = vmatprep.subr.mxu0 0.0
        %309 = vmatpush1.msra.mxu0 %v291
        %310 = vmatprep.subr.mxu0 0.0
        %311 = vmatpush1.msra.mxu0 %v292
        %312 = vmatprep.subr.mxu0 0.0
        %313 = vmatpush1.msra.mxu0 %v293
        %314 = vmatprep.subr.mxu0 0.0
        %315 = vmatpush1.msra.mxu0 %v294
        %316 = vmatprep.subr.mxu0 0.0
        %317 = vmatpush1.msra.mxu0 %v295
        %318 = vmatprep.subr.mxu0 0.0
        %319 = vmatpush1.msra.mxu0 %v296
        %320 = vmatprep.subr.mxu0 0.0
        %321 = vmatpush1.msra.mxu0 %v297
        %322 = vmatprep.subr.mxu0 0.0
        %323 = vmatpush1.msra.mxu0 %v298
        %324 = vmatprep.subr.mxu0 0.0
        %325 = vmatpush1.msra.mxu0 0.0
        %326 = vmatprep.subr.mxu0 0.0
        %327 = vmatpush1.msra.mxu0 0.0
        %328 = vmatprep.subr.mxu0 0.0
        %329 = vmatpush1.msra.mxu0 0.0
        %330 = vmatprep.subr.mxu0 0.0
        %331 = vmatpush1.msra.mxu0 0.0
        %332 = vmatprep.subr.mxu0 0.0
        %333 = vmatpush1.msra.mxu0 0.0
        %334 = vmatprep.subr.mxu0 0.0
        %335 = vmatpush1.msra.mxu0 0.0
        %336 = vmatprep.subr.mxu0 0.0
        %337 = vmatpush1.msra.mxu0 0.0
        %338 = vmatprep.subr.mxu0 0.0
        %339 = vmatpush1.msra.mxu0 0.0
        %340 = vmatprep.subr.mxu0 0.0
        %341 = vmatpush1.msra.mxu0 0.0
        %342 = vmatprep.subr.mxu0 0.0
        %343 = vmatpush1.msra.mxu0 0.0
        %344 = vmatprep.subr.mxu0 0.0
        %345 = vmatpush1.msra.mxu0 0.0
        %346 = vmatprep.subr.mxu0 0.0
        %347 = vmatpush1.msra.mxu0 0.0
        %348 = vmatprep.subr.mxu0 0.0
        %349 = vmatpush1.msra.mxu0 0.0
        %350 = vmatprep.subr.mxu0 0.0
        %351 = vmatpush1.msra.mxu0 0.0
        %352 = vmatprep.subr.mxu0 0.0
        %353 = vmatpush1.msra.mxu0 0.0
        %354 = vmatprep.subr.mxu0 0.0
        %355 = vmatpush1.msra.mxu0 0.0
        %356 = vmatprep.subr.mxu0 0.0
        %357 = vmatpush1.msra.mxu0 0.0
        %358 = vmatprep.subr.mxu0 0.0
        %359 = vmatpush1.msra.mxu0 0.0
        %360 = vmatprep.subr.mxu0 0.0
        %361 = vmatpush1.msra.mxu0 0.0
        %362 = vmatprep.subr.mxu0 0.0
        %363 = vmatpush1.msra.mxu0 0.0
        %364 = vmatprep.subr.mxu0 0.0
        %365 = vmatpush1.msra.mxu0 0.0
        %366 = vmatprep.subr.mxu0 0.0
        %367 = vmatpush1.msra.mxu0 0.0
        %368 = vmatprep.subr.mxu0 0.0
        %369 = vmatpush1.msra.mxu0 0.0
        %370 = vmatprep.subr.mxu0 0.0
        %371 = vmatpush1.msra.mxu0 0.0
        %372 = vmatprep.mubr.f32.mxu0 0.0
        %373 = vmatmul.mubr.f32.gmra.mrb[0].mxu0 %v303
        %v374 = vpop.f32.mrb[0].mxu0
        %v375 = vadd.f32 0.0, %v374
        %v376 = vpop.f32.mrb[0].mxu0
        %377 = vmatprep.mubr.f32.mxu0 0.0
        %378 = vmatmul.mubr.f32.gmra.mrb[0].mxu0 %v306
        %v379 = vpop.f32.mrb[0].mxu0
        %v380 = vadd.f32 0.0, %v379
        %v381 = vpop.f32.mrb[0].mxu0
        %382 = vdwg.mxu0
        %v384 = vsel %vm301, %v375, 0
        %v387 = vsel %vm301, %v380, 0
        %v390 = vsel %vm301, %v283, 0
        %v393 = vsel %vm301, %v284, 0
        %v396 = vsel %vm301, %v285, 0
        %v399 = vsel %vm301, %v286, 0
        %v402 = vsel %vm301, %v287, 0
        %v405 = vsel %vm301, %v288, 0
        %v408 = vsel %vm301, %v289, 0
        %v411 = vsel %vm301, %v290, 0
        %413 = vmatprep.subr.mxu0 0.0
        %414 = vmatpush1.xpose.msra.mxu0 %v390
        %415 = vmatprep.subr.mxu0 0.0
        %416 = vmatpush1.xpose.msra.mxu0 %v393
        %417 = vmatprep.subr.mxu0 0.0
        %418 = vmatpush1.xpose.msra.mxu0 %v396
        %419 = vmatprep.subr.mxu0 0.0
        %420 = vmatpush1.xpose.msra.mxu0 %v399
        %421 = vmatprep.subr.mxu0 0.0
        %422 = vmatpush1.xpose.msra.mxu0 %v402
        %423 = vmatprep.subr.mxu0 0.0
        %424 = vmatpush1.xpose.msra.mxu0 %v405
        %425 = vmatprep.subr.mxu0 0.0
        %426 = vmatpush1.xpose.msra.mxu0 %v408
        %427 = vmatprep.subr.mxu0 0.0
        %428 = vmatpush1.xpose.msra.mxu0 %v411
        %429 = vmatprep.subr.mxu0 0.0
        %430 = vmatpush1.xpose.msra.mxu0 0.0
        %431 = vmatprep.subr.mxu0 0.0
        %432 = vmatpush1.xpose.msra.mxu0 0.0
        %433 = vmatprep.subr.mxu0 0.0
        %434 = vmatpush1.xpose.msra.mxu0 0.0
        %435 = vmatprep.subr.mxu0 0.0
        %436 = vmatpush1.xpose.msra.mxu0 0.0
        %437 = vmatprep.subr.mxu0 0.0
        %438 = vmatpush1.xpose.msra.mxu0 0.0
        %439 = vmatprep.subr.mxu0 0.0
        %440 = vmatpush1.xpose.msra.mxu0 0.0
        %441 = vmatprep.subr.mxu0 0.0
        %442 = vmatpush1.xpose.msra.mxu0 0.0
        %443 = vmatprep.subr.mxu0 0.0
        %444 = vmatpush1.xpose.msra.mxu0 0.0
        %445 = vmatprep.subr.mxu0 0.0
        %446 = vmatpush1.xpose.msra.mxu0 0.0
        %447 = vmatprep.subr.mxu0 0.0
        %448 = vmatpush1.xpose.msra.mxu0 0.0
        %449 = vmatprep.subr.mxu0 0.0
        %450 = vmatpush1.xpose.msra.mxu0 0.0
        %451 = vmatprep.subr.mxu0 0.0
        %452 = vmatpush1.xpose.msra.mxu0 0.0
        %453 = vmatprep.subr.mxu0 0.0
        %454 = vmatpush1.xpose.msra.mxu0 0.0
        %455 = vmatprep.subr.mxu0 0.0
        %456 = vmatpush1.xpose.msra.mxu0 0.0
        %457 = vmatprep.subr.mxu0 0.0
        %458 = vmatpush1.xpose.msra.mxu0 0.0
        %459 = vmatprep.subr.mxu0 0.0
        %460 = vmatpush1.xpose.msra.mxu0 0.0
        %461 = vmatprep.subr.mxu0 0.0
        %462 = vmatpush1.xpose.msra.mxu0 0.0
        %463 = vmatprep.subr.mxu0 0.0
        %464 = vmatpush1.xpose.msra.mxu0 0.0
        %465 = vmatprep.subr.mxu0 0.0
        %466 = vmatpush1.xpose.msra.mxu0 0.0
        %467 = vmatprep.subr.mxu0 0.0
        %468 = vmatpush1.xpose.msra.mxu0 0.0
        %469 = vmatprep.subr.mxu0 0.0
        %470 = vmatpush1.xpose.msra.mxu0 0.0
        %471 = vmatprep.subr.mxu0 0.0
        %472 = vmatpush1.xpose.msra.mxu0 0.0
        %473 = vmatprep.subr.mxu0 0.0
        %474 = vmatpush1.xpose.msra.mxu0 0.0
        %475 = vmatprep.subr.mxu0 0.0
        %476 = vmatpush1.xpose.msra.mxu0 0.0
        %477 = vmatprep.mubr.f32.mxu0 0.0
        %478 = vmatmul.mubr.f32.gmra.mrb[0].mxu0 %v384
        %v479 = vpop.f32.mrb[0].mxu0
        %v480 = vadd.f32 0.0, %v479
        %v481 = vpop.f32.mrb[0].mxu0
        %482 = vmatprep.mubr.f32.mxu0 0.0
        %483 = vmatmul.mubr.f32.gmra.mrb[0].mxu0 %v387
        %v484 = vpop.f32.mrb[0].mxu0
        %v485 = vadd.f32 0.0, %v484
        %v486 = vpop.f32.mrb[0].mxu0
        %487 = vdwg.mxu0
        %488 = vst.msk [vmem:[%s282] sm:$0xff] %vm301, %v480
        %489 = vst.msk [vmem:[%s282 + $0x8] sm:$0xff] %vm301, %v485
        %s490 = sand.u32 %s125, 1
        %s491 = scalar_lea.sflag [#allocation4], %s490
        %s492 = sand.u32 %s125, 1
        %s493 = smul.addr %s492, 16
        %s494 = scalar_lea.vmem [#allocation8], %s493
        // Predicated region
        $region45: #{tpu_custom_call.1} parent=31 // pred_check
          %p495 = pneg %p135
        $region46: #{tpu_custom_call.1} parent=31 // pred_check_branch
          %497 = sbr.rel (%p495) target = $region48
        $region47: #{tpu_custom_call.1} parent=31 // pred_region
          %s499 = ssub.s32 256, 256
          %500 = vsyncadd %s491, %s499
          %s501 = smul.addr %s28, 2
          %s502 = sadd.s32 %s27, %s501
          %s503 = smul.addr %s502, 128
          %s504 = scalar_lea.hbm %s3, %s503
          %s505 = sshll.u32 %s494, 4
          %s506 = int_to_ptr.vmem [resolvable:$true] %s505
          %511 = dma.vmem_to_hbm [thread:$0]  %s506, 256, %s504, %s491, 128, 768, 8
        $region48: #{tpu_custom_call.1} parent=31 // pred_fallthru
          _
      $region32: #{tpu_custom_call.1} parent=5 // pred_fallthru
        _
      %p512 = scmp.le.s32.totalorder 2, %s18
      // Predicated region
      $region49: #{tpu_custom_call.1} parent=5 // pred_check
        %p513 = pneg %p512
      $region50: #{tpu_custom_call.1} parent=5 // pred_check_branch
        %515 = sbr.rel (%p513) target = $region52
      $region51: #{tpu_custom_call.1} parent=5 // pred_region
        %s516 = ssub.s32 %s18, 2
        // Predicated region
        $region53: #{tpu_custom_call.1} parent=51 // pred_check
          %p517 = pneg %p141
        $region54: #{tpu_custom_call.1} parent=51 // pred_check_branch
          %519 = sbr.rel (%p517) target = $region56
        $region55: #{tpu_custom_call.1} parent=51 // pred_region
          %s520 = sand.u32 %s126, 1
          %s521 = scalar_lea.sflag [#allocation4], %s520
          %s522 = sand.u32 %s126, 1
          %s523 = smul.addr %s522, 16
          %s524 = scalar_lea.vmem [#allocation8], %s523
          %525 = dma.done %s521, 256
        $region56: #{tpu_custom_call.1} parent=51 // pred_fallthru
          _
      $region52: #{tpu_custom_call.1} parent=5 // pred_fallthru
        _
    $region6: #{tpu_custom_call.1} parent=1 // loop_footer
      %s22 = sadd.s32 1, %s18
    $region7: #{tpu_custom_call.1} parent=1 // loop_footer_branch
      %17 = sbr.rel target = $region3
    $region8: #{tpu_custom_call.1} parent=1 // loop_exit
      _
    %526 = vsyncpa [#allocation3], 1
    %s527 = scalar_lea.sflag [#allocation3], 1
    %528 = vsyncpa %s527, 1
    %529 = vsyncpa [#allocation6], 1
    %s530 = scalar_lea.sflag [#allocation6], 1
    %531 = vsyncpa %s530, 1
    %532 = vsyncpa [#allocation4], 1
    %s533 = scalar_lea.sflag [#allocation4], 1
    %534 = vsyncpa %s533, 1

</llo_original>
